<compile_context>
chip_gen: v5e
topology: v5e:2x2
jax: 0.10.0
libtpu: 0.0.40
codegen_flags: <defaults>
</compile_context>

<pallas_src>
from functools import partial

import jax
import jax.numpy as jnp
from jax import lax
from jax.experimental import pallas as pl
from jax.experimental.pallas import tpu as pltpu


# ----------------------------------------------------------------------------
# Fused kernel: linears[0] -> per-head distance attention -> linears[1]
# (one (batch, query-tile) element per grid step; everything VMEM-resident)
# ----------------------------------------------------------------------------
def _mhda_kernel(wd_ref, bd_ref,            # SMEM: (h,) per-head distance params
                 x_ref,                     # VMEM: (1, S,  D)  f32 (all keys)
                 d_ref,                     # VMEM: (1, TQ, S)  bf16 distances
                 m_ref,                     # VMEM: (1, 1,  S)  f32 key mask
                 w0_ref, b0_ref,            # linears[0]: (D,D) f32, (1,D) f32
                 w1_ref, b1_ref,            # linears[1]: (D,D) f32, (1,D) f32
                 hmask_ref,                 # (h, 1, D) f32 head column mask
                 o_ref, *, num_heads):
    f32, bf16 = jnp.float32, jnp.bfloat16

    # linears[0]: per-key values (needs all S keys).  bf16 MXU operands.
    v = jnp.dot(x_ref[0].astype(bf16), w0_ref[...].astype(bf16),
                preferred_element_type=f32) + b0_ref[...]          # (S, D) f32

    # Key mask hoisted out of the head loop: additive bias, computed once.
    bias = jnp.where(m_ref[0] > 0.0, f32(0.0), f32(-1e9))          # (1, S)

    dists = d_ref[0].astype(f32)                                   # (TQ, S)

    # create_raw_attn (representative): per-head affine of distance followed by
    # a key-masked softmax over keys.  Heads are few & static -> unrolled; the
    # per-head probabilities are concatenated along the key axis so that the
    # head application below is ONE MXU matmul (internal accumulation).
    # TODO(synk): for h >= 8 batch the score/exp pass across heads instead of
    #             unrolling (bounds vreg live ranges).
    p_list = []
    for hh in range(num_heads):
        scores = dists * wd_ref[hh] + (bd_ref[hh] + bias)          # (TQ, S)
        scores = scores - jnp.max(scores, axis=-1, keepdims=True)
        e = jnp.exp(scores)
        p_list.append(e * pl.reciprocal(jnp.sum(e, axis=-1, keepdims=True),
                                        approx=True))
    p_cat = jnp.concatenate(p_list, axis=-1).astype(bf16)          # (TQ, h*S)

    # V_stack[hh*S + k, :] = v[k, :] restricted to head hh's columns.
    s_full, d_model = v.shape
    v_stack = (v[None, :, :] * hmask_ref[...])                     # (h, S, D) f32
    v_stack = v_stack.reshape(num_heads * s_full, d_model).astype(bf16)

    # Single fused head-application matmul: y[q, :] = sum_h p_h[q, :] @ v_h
    y = jnp.dot(p_cat, v_stack, preferred_element_type=f32)        # (TQ, D) f32

    # linears[1]
    out = jnp.dot(y.astype(bf16), w1_ref[...].astype(bf16),
                  preferred_element_type=f32) + b1_ref[...]
    o_ref[0] = out.astype(o_ref.dtype)


def multi_headed_dist_attention(dists, x, mask, params, *, num_heads, tq=None):
    """dists: (B,S,S) f32, x: (B,S,D) f32, mask: (B,1,S) f32 -> (B,S,D) f32."""
    B, S, D = x.shape
    assert D % num_heads == 0
    d_k = D // num_heads
    if tq is None:
        tq = S                      # demo shapes: one query tile per batch elem
    assert S % tq == 0
    nq = S // tq

    # Column mask selecting each head's d_k slice of the (S, D) value matrix.
    head_mask = (jnp.arange(D)[None, :] // d_k
                 == jnp.arange(num_heads)[:, None]).astype(jnp.float32)
    head_mask = head_mask[:, None, :]                              # (h, 1, D)

    # Store the dominant HBM stream (dists, ~4*B*S^2 bytes in f32) as bf16.
    dists_bf16 = dists.astype(jnp.bfloat16)

    flops = B * (nq * 2 * S * D * D                    # linears[0] (per q tile)
                 + 2 * num_heads * S * S * D           # fused head-apply matmul
                 + 2 * S * D * D)                      # linears[1]
    transcendentals = B * num_heads * S * S
    bytes_accessed = (2 * B * S * S                    # dists (bf16)
                      + 4 * B * S * D * (nq + 1)       # x (per tile) + out
                      + 4 * B * S                      # mask
                      + 4 * (2 * D * D + 2 * D + 2 * num_heads + num_heads * D))

    smem_spec = pl.BlockSpec(memory_space=pltpu.MemorySpace.SMEM)
    in_specs = [
        smem_spec,                                            # wd  (h,)
        smem_spec,                                            # bd  (h,)
        pl.BlockSpec((1, S, D), lambda b, q: (b, 0, 0)),      # x  (all keys)
        pl.BlockSpec((1, tq, S), lambda b, q: (b, q, 0)),     # dists (q tile)
        pl.BlockSpec((1, 1, S), lambda b, q: (b, 0, 0)),      # mask
        pl.BlockSpec((D, D), lambda b, q: (0, 0)),            # w0
        pl.BlockSpec((1, D), lambda b, q: (0, 0)),            # b0
        pl.BlockSpec((D, D), lambda b, q: (0, 0)),            # w1
        pl.BlockSpec((1, D), lambda b, q: (0, 0)),            # b1
        pl.BlockSpec((num_heads, 1, D), lambda b, q: (0, 0, 0)),  # head mask
    ]

    return pl.pallas_call(
        partial(_mhda_kernel, num_heads=num_heads),
        out_shape=jax.ShapeDtypeStruct((B, S, D), jnp.float32),
        grid=(B, nq),
        in_specs=in_specs,
        out_specs=pl.BlockSpec((1, tq, D), lambda b, q: (b, q, 0)),
        compiler_params=pltpu.CompilerParams(
            dimension_semantics=("parallel", "parallel")),
        cost_estimate=pl.CostEstimate(
            flops=flops, transcendentals=transcendentals,
            bytes_accessed=bytes_accessed),
    )(params["wd"], params["bd"], x, dists_bf16, mask,
      params["w0"], params["b0"], params["w1"], params["b1"], head_mask)


# ----------------------------------------------------------------------------
# Pure-JAX reference (mirrors the PyTorch forward exactly, heads explicit)
# ----------------------------------------------------------------------------
def reference_forward(dists, x, mask, params, *, num_heads):
    B, S, D = x.shape
    d_k = D // num_heads
    hp = lax.Precision.HIGHEST

    v = jnp.einsum("bsd,de->bse", x, params["w0"], precision=hp) + params["b0"][None]
    v = v.reshape(B, S, num_heads, d_k)

    # create_raw_attn (same representative definition): (B, Sq, Sk, h)
    scores = (dists[..., None] * params["wd"][None, None, None, :]
              + params["bd"][None, None, None, :])
    scores = jnp.where(mask[..., None] > 0.0, scores, -1e9)
    attn = jax.nn.softmax(scores, axis=2)                     # over keys

    attn_t = jnp.transpose(attn, (0, 3, 1, 2))                # (B,h,Sq,Sk)
    v_t = jnp.transpose(v, (0, 2, 1, 3))                      # (B,h,S,d_k)
    y = jnp.einsum("bhqk,bhkd->bhqd", attn_t, v_t, precision=hp)
    y = jnp.transpose(y, (0, 2, 1, 3)).reshape(B, S, D)

    return jnp.einsum("bsd,de->bse", y, params["w1"], precision=hp) + params["b1"][None]


# ----------------------------------------------------------------------------
if __name__ == "__main__":
    B, S, D, H = 2, 16, 32, 4          # batch, atoms, d_model, heads

    key = jax.random.PRNGKey(0)
    kx, kd, kw0, kb0, kw1, kb1, kwd, kbd = jax.random.split(key, 8)

    x = jax.random.normal(kx, (B, S, D), jnp.float32)
    dists = jnp.abs(jax.random.normal(kd, (B, S, S), jnp.float32))
    lengths = jnp.array([S, S - 3])
    mask = (jnp.arange(S)[None, :] < lengths[:, None]).astype(jnp.float32)
    mask = mask[:, None, :]                                   # (B, 1, S)

    params = dict(
        w0=0.05 * jax.random.normal(kw0, (D, D), jnp.float32),
        b0=0.01 * jax.random.normal(kb0, (1, D), jnp.float32),
        w1=0.05 * jax.random.normal(kw1, (D, D), jnp.float32),
        b1=0.01 * jax.random.normal(kb1, (1, D), jnp.float32),
        wd=-0.5 * jnp.abs(jax.random.normal(kwd, (H,), jnp.float32)),
        bd=0.1 * jax.random.normal(kbd, (H,), jnp.float32),
    )

    out = multi_headed_dist_attention(dists, x, mask, params, num_heads=H)
    out = jax.block_until_ready(out)

    # The kernel deliberately stores dists as bf16 in HBM (bandwidth); evaluate
    # the reference on the same stored values so the check isolates kernel math
    # (bf16 MXU operand rounding is absorbed by the tolerance).
    dists_q = dists.astype(jnp.bfloat16).astype(jnp.float32)
    ref = reference_forward(dists_q, x, mask, params, num_heads=H)

    assert out.shape == (B, S, D)
    assert bool(jnp.all(jnp.isfinite(out)))
    assert bool(jnp.allclose(out, ref, atol=2e-2, rtol=2e-2))
    print("KERNEL_OK")
</pallas_src>

<mosaic_0001>
module attributes {stable_mosaic.version = 11 : i64} {
  func.func @_mhda_kernel(%arg0: i32, %arg1: i32, %arg2: memref<4xf32, #tpu.memory_space<smem>>, %arg3: memref<4xf32, #tpu.memory_space<smem>>, %arg4: memref<1x16x32xf32, #tpu.memory_space<vmem>>, %arg5: memref<1x16x16xbf16, #tpu.memory_space<vmem>>, %arg6: memref<1x1x16xf32, #tpu.memory_space<vmem>>, %arg7: memref<32x32xf32, #tpu.memory_space<vmem>>, %arg8: memref<1x32xf32, #tpu.memory_space<vmem>>, %arg9: memref<32x32xf32, #tpu.memory_space<vmem>>, %arg10: memref<1x32xf32, #tpu.memory_space<vmem>>, %arg11: memref<4x1x32xf32, #tpu.memory_space<vmem>>, %arg12: memref<1x16x32xf32, #tpu.memory_space<vmem>>) attributes {dimension_semantics = [#tpu.dimension_semantics<parallel>, #tpu.dimension_semantics<parallel>], iteration_bounds = array<i64: 2, 1>, scalar_prefetch = 0 : i64, scratch_operands = 0 : i64, tpu.core_type = #tpu.core_type<tc>, window_params = [{transform_indices = @transform_0, window_bounds = array<i64: 4>}, {transform_indices = @transform_1, window_bounds = array<i64: 4>}, {transform_indices = @transform_2, window_bounds = array<i64: 1, 16, 32>}, {transform_indices = @transform_3, window_bounds = array<i64: 1, 16, 16>}, {transform_indices = @transform_4, window_bounds = array<i64: 1, 1, 16>}, {pipeline_mode = #tpu.pipeline_mode<synchronous>, transform_indices = @transform_5, window_bounds = array<i64: 32, 32>}, {pipeline_mode = #tpu.pipeline_mode<synchronous>, transform_indices = @transform_6, window_bounds = array<i64: 1, 32>}, {pipeline_mode = #tpu.pipeline_mode<synchronous>, transform_indices = @transform_7, window_bounds = array<i64: 32, 32>}, {pipeline_mode = #tpu.pipeline_mode<synchronous>, transform_indices = @transform_8, window_bounds = array<i64: 1, 32>}, {pipeline_mode = #tpu.pipeline_mode<synchronous>, transform_indices = @transform_9, window_bounds = array<i64: 4, 1, 32>}, {transform_indices = @transform_10, window_bounds = array<i64: 1, 16, 32>}]} {
    %c0 = arith.constant 0 : index
    %c0_0 = arith.constant 0 : index
    %c0_1 = arith.constant 0 : index
    %0 = vector.load %arg4[%c0, %c0_0, %c0_1] : memref<1x16x32xf32, #tpu.memory_space<vmem>>, vector<1x16x32xf32>
    %1 = vector.shape_cast %0 : vector<1x16x32xf32> to vector<16x32xf32>
    %2 = arith.truncf %1 : vector<16x32xf32> to vector<16x32xbf16>
    %c0_2 = arith.constant 0 : index
    %c0_3 = arith.constant 0 : index
    %3 = vector.load %arg7[%c0_2, %c0_3] : memref<32x32xf32, #tpu.memory_space<vmem>>, vector<32x32xf32>
    %4 = arith.truncf %3 : vector<32x32xf32> to vector<32x32xbf16>
    %cst = arith.constant dense<0.000000e+00> : vector<16x32xf32>
    %5 = tpu.matmul %2, %4, %cst {dimension_numbers = #tpu.dot_dimension_numbers<[1], [0], [0], [1], [0, 0, 1, 1], [], []>} : vector<16x32xbf16>, vector<32x32xbf16>, vector<16x32xf32> -> vector<16x32xf32>
    %c0_4 = arith.constant 0 : index
    %c0_5 = arith.constant 0 : index
    %6 = vector.load %arg8[%c0_4, %c0_5] : memref<1x32xf32, #tpu.memory_space<vmem>>, vector<1x32xf32>
    %7 = vector.broadcast %6 : vector<1x32xf32> to vector<16x32xf32>
    %8 = arith.addf %5, %7 : vector<16x32xf32>
    %c0_6 = arith.constant 0 : index
    %c0_7 = arith.constant 0 : index
    %c0_8 = arith.constant 0 : index
    %9 = vector.load %arg6[%c0_6, %c0_7, %c0_8] : memref<1x1x16xf32, #tpu.memory_space<vmem>>, vector<1x1x16xf32>
    %10 = vector.shape_cast %9 : vector<1x1x16xf32> to vector<1x16xf32>
    %cst_9 = arith.constant 0.000000e+00 : f32
    %11 = vector.broadcast %cst_9 : f32 to vector<1x16xf32>
    %12 = arith.cmpf ogt, %10, %11 : vector<1x16xf32>
    %cst_10 = arith.constant 0.000000e+00 : f32
    %cst_11 = arith.constant -1.000000e+09 : f32
    %13 = vector.broadcast %cst_10 : f32 to vector<1x16xf32>
    %14 = vector.broadcast %cst_11 : f32 to vector<1x16xf32>
    %15 = arith.select %12, %13, %14 : vector<1x16xi1>, vector<1x16xf32>
    %c0_12 = arith.constant 0 : index
    %c0_13 = arith.constant 0 : index
    %c0_14 = arith.constant 0 : index
    %16 = vector.load %arg5[%c0_12, %c0_13, %c0_14] : memref<1x16x16xbf16, #tpu.memory_space<vmem>>, vector<1x16x16xbf16>
    %17 = vector.shape_cast %16 : vector<1x16x16xbf16> to vector<16x16xbf16>
    %18 = arith.extf %17 : vector<16x16xbf16> to vector<16x16xf32>
    %c0_15 = arith.constant 0 : index
    %19 = memref.load %arg2[%c0_15] : memref<4xf32, #tpu.memory_space<smem>>
    %20 = vector.broadcast %19 : f32 to vector<16x16xf32>
    %21 = arith.mulf %18, %20 : vector<16x16xf32>
    %c0_16 = arith.constant 0 : index
    %22 = memref.load %arg3[%c0_16] : memref<4xf32, #tpu.memory_space<smem>>
    %23 = vector.broadcast %22 : f32 to vector<1x16xf32>
    %24 = arith.addf %23, %15 : vector<1x16xf32>
    %25 = vector.broadcast %24 : vector<1x16xf32> to vector<16x16xf32>
    %26 = arith.addf %21, %25 : vector<16x16xf32>
    %cst_17 = arith.constant dense<0xFF800000> : vector<16xf32>
    %27 = vector.multi_reduction <maximumf>, %26, %cst_17 [1] : vector<16x16xf32> to vector<16xf32>
    %28 = vector.shape_cast %27 : vector<16xf32> to vector<16x1xf32>
    %29 = vector.broadcast %28 : vector<16x1xf32> to vector<16x16xf32>
    %30 = arith.subf %26, %29 : vector<16x16xf32>
    %31 = math.exp %30 : vector<16x16xf32>
    %cst_18 = arith.constant dense<0.000000e+00> : vector<16xf32>
    %32 = vector.multi_reduction <add>, %31, %cst_18 [1] : vector<16x16xf32> to vector<16xf32>
    %33 = vector.shape_cast %32 : vector<16xf32> to vector<16x1xf32>
    %34 = tpu.reciprocal %33 {approx = true} : vector<16x1xf32> -> vector<16x1xf32>
    %35 = vector.broadcast %34 : vector<16x1xf32> to vector<16x16xf32>
    %36 = arith.mulf %31, %35 : vector<16x16xf32>
    %c1 = arith.constant 1 : index
    %37 = memref.load %arg2[%c1] : memref<4xf32, #tpu.memory_space<smem>>
    %38 = vector.broadcast %37 : f32 to vector<16x16xf32>
    %39 = arith.mulf %18, %38 : vector<16x16xf32>
    %c1_19 = arith.constant 1 : index
    %40 = memref.load %arg3[%c1_19] : memref<4xf32, #tpu.memory_space<smem>>
    %41 = vector.broadcast %40 : f32 to vector<1x16xf32>
    %42 = arith.addf %41, %15 : vector<1x16xf32>
    %43 = vector.broadcast %42 : vector<1x16xf32> to vector<16x16xf32>
    %44 = arith.addf %39, %43 : vector<16x16xf32>
    %cst_20 = arith.constant dense<0xFF800000> : vector<16xf32>
    %45 = vector.multi_reduction <maximumf>, %44, %cst_20 [1] : vector<16x16xf32> to vector<16xf32>
    %46 = vector.shape_cast %45 : vector<16xf32> to vector<16x1xf32>
    %47 = vector.broadcast %46 : vector<16x1xf32> to vector<16x16xf32>
    %48 = arith.subf %44, %47 : vector<16x16xf32>
    %49 = math.exp %48 : vector<16x16xf32>
    %cst_21 = arith.constant dense<0.000000e+00> : vector<16xf32>
    %50 = vector.multi_reduction <add>, %49, %cst_21 [1] : vector<16x16xf32> to vector<16xf32>
    %51 = vector.shape_cast %50 : vector<16xf32> to vector<16x1xf32>
    %52 = tpu.reciprocal %51 {approx = true} : vector<16x1xf32> -> vector<16x1xf32>
    %53 = vector.broadcast %52 : vector<16x1xf32> to vector<16x16xf32>
    %54 = arith.mulf %49, %53 : vector<16x16xf32>
    %c2 = arith.constant 2 : index
    %55 = memref.load %arg2[%c2] : memref<4xf32, #tpu.memory_space<smem>>
    %56 = vector.broadcast %55 : f32 to vector<16x16xf32>
    %57 = arith.mulf %18, %56 : vector<16x16xf32>
    %c2_22 = arith.constant 2 : index
    %58 = memref.load %arg3[%c2_22] : memref<4xf32, #tpu.memory_space<smem>>
    %59 = vector.broadcast %58 : f32 to vector<1x16xf32>
    %60 = arith.addf %59, %15 : vector<1x16xf32>
    %61 = vector.broadcast %60 : vector<1x16xf32> to vector<16x16xf32>
    %62 = arith.addf %57, %61 : vector<16x16xf32>
    %cst_23 = arith.constant dense<0xFF800000> : vector<16xf32>
    %63 = vector.multi_reduction <maximumf>, %62, %cst_23 [1] : vector<16x16xf32> to vector<16xf32>
    %64 = vector.shape_cast %63 : vector<16xf32> to vector<16x1xf32>
    %65 = vector.broadcast %64 : vector<16x1xf32> to vector<16x16xf32>
    %66 = arith.subf %62, %65 : vector<16x16xf32>
    %67 = math.exp %66 : vector<16x16xf32>
    %cst_24 = arith.constant dense<0.000000e+00> : vector<16xf32>
    %68 = vector.multi_reduction <add>, %67, %cst_24 [1] : vector<16x16xf32> to vector<16xf32>
    %69 = vector.shape_cast %68 : vector<16xf32> to vector<16x1xf32>
    %70 = tpu.reciprocal %69 {approx = true} : vector<16x1xf32> -> vector<16x1xf32>
    %71 = vector.broadcast %70 : vector<16x1xf32> to vector<16x16xf32>
    %72 = arith.mulf %67, %71 : vector<16x16xf32>
    %c3 = arith.constant 3 : index
    %73 = memref.load %arg2[%c3] : memref<4xf32, #tpu.memory_space<smem>>
    %74 = vector.broadcast %73 : f32 to vector<16x16xf32>
    %75 = arith.mulf %18, %74 : vector<16x16xf32>
    %c3_25 = arith.constant 3 : index
    %76 = memref.load %arg3[%c3_25] : memref<4xf32, #tpu.memory_space<smem>>
    %77 = vector.broadcast %76 : f32 to vector<1x16xf32>
    %78 = arith.addf %77, %15 : vector<1x16xf32>
    %79 = vector.broadcast %78 : vector<1x16xf32> to vector<16x16xf32>
    %80 = arith.addf %75, %79 : vector<16x16xf32>
    %cst_26 = arith.constant dense<0xFF800000> : vector<16xf32>
    %81 = vector.multi_reduction <maximumf>, %80, %cst_26 [1] : vector<16x16xf32> to vector<16xf32>
    %82 = vector.shape_cast %81 : vector<16xf32> to vector<16x1xf32>
    %83 = vector.broadcast %82 : vector<16x1xf32> to vector<16x16xf32>
    %84 = arith.subf %80, %83 : vector<16x16xf32>
    %85 = math.exp %84 : vector<16x16xf32>
    %cst_27 = arith.constant dense<0.000000e+00> : vector<16xf32>
    %86 = vector.multi_reduction <add>, %85, %cst_27 [1] : vector<16x16xf32> to vector<16xf32>
    %87 = vector.shape_cast %86 : vector<16xf32> to vector<16x1xf32>
    %88 = tpu.reciprocal %87 {approx = true} : vector<16x1xf32> -> vector<16x1xf32>
    %89 = vector.broadcast %88 : vector<16x1xf32> to vector<16x16xf32>
    %90 = arith.mulf %85, %89 : vector<16x16xf32>
    %91 = tpu.concatenate %36, %54, %72, %90 in 1 : vector<16x16xf32>, vector<16x16xf32>, vector<16x16xf32>, vector<16x16xf32> -> vector<16x64xf32>
    %92 = arith.truncf %91 : vector<16x64xf32> to vector<16x64xbf16>
    %93 = vector.shape_cast %8 : vector<16x32xf32> to vector<1x16x32xf32>
    %c0_28 = arith.constant 0 : index
    %c0_29 = arith.constant 0 : index
    %c0_30 = arith.constant 0 : index
    %94 = vector.load %arg11[%c0_28, %c0_29, %c0_30] : memref<4x1x32xf32, #tpu.memory_space<vmem>>, vector<4x1x32xf32>
    %95 = vector.broadcast %93 : vector<1x16x32xf32> to vector<4x16x32xf32>
    %96 = vector.broadcast %94 : vector<4x1x32xf32> to vector<4x16x32xf32>
    %97 = arith.mulf %95, %96 : vector<4x16x32xf32>
    %98 = vector.shape_cast %97 : vector<4x16x32xf32> to vector<64x32xf32>
    %99 = arith.truncf %98 : vector<64x32xf32> to vector<64x32xbf16>
    %cst_31 = arith.constant dense<0.000000e+00> : vector<16x32xf32>
    %100 = tpu.matmul %92, %99, %cst_31 {dimension_numbers = #tpu.dot_dimension_numbers<[1], [0], [0], [1], [0, 0, 1, 1], [], []>} : vector<16x64xbf16>, vector<64x32xbf16>, vector<16x32xf32> -> vector<16x32xf32>
    %101 = arith.truncf %100 : vector<16x32xf32> to vector<16x32xbf16>
    %c0_32 = arith.constant 0 : index
    %c0_33 = arith.constant 0 : index
    %102 = vector.load %arg9[%c0_32, %c0_33] : memref<32x32xf32, #tpu.memory_space<vmem>>, vector<32x32xf32>
    %103 = arith.truncf %102 : vector<32x32xf32> to vector<32x32xbf16>
    %cst_34 = arith.constant dense<0.000000e+00> : vector<16x32xf32>
    %104 = tpu.matmul %101, %103, %cst_34 {dimension_numbers = #tpu.dot_dimension_numbers<[1], [0], [0], [1], [0, 0, 1, 1], [], []>} : vector<16x32xbf16>, vector<32x32xbf16>, vector<16x32xf32> -> vector<16x32xf32>
    %c0_35 = arith.constant 0 : index
    %c0_36 = arith.constant 0 : index
    %105 = vector.load %arg10[%c0_35, %c0_36] : memref<1x32xf32, #tpu.memory_space<vmem>>, vector<1x32xf32>
    %106 = vector.broadcast %105 : vector<1x32xf32> to vector<16x32xf32>
    %107 = arith.addf %104, %106 : vector<16x32xf32>
    %c0_37 = arith.constant 0 : index
    %c0_38 = arith.constant 0 : index
    %c0_39 = arith.constant 0 : index
    %108 = vector.load %arg12[%c0_37, %c0_38, %c0_39] : memref<1x16x32xf32, #tpu.memory_space<vmem>>, vector<1x16x32xf32>
    %109 = vector.shape_cast %108 : vector<1x16x32xf32> to vector<16x32xf32>
    %110 = vector.shape_cast %107 : vector<16x32xf32> to vector<1x16x32xf32>
    tpu.vector_store %arg12[%c0_37, %c0_38, %c0_39], %110 {strides = array<i32>} : memref<1x16x32xf32, #tpu.memory_space<vmem>>, vector<1x16x32xf32>,
    return
  }
  func.func @transform_0(%arg0: i32, %arg1: i32) -> i32 {
    %c0_i32 = arith.constant 0 : i32
    %c0_i32_0 = arith.constant 0 : i32
    return %c0_i32 : i32
  }
  func.func @transform_1(%arg0: i32, %arg1: i32) -> i32 {
    %c0_i32 = arith.constant 0 : i32
    %c0_i32_0 = arith.constant 0 : i32
    return %c0_i32 : i32
  }
  func.func @transform_2(%arg0: i32, %arg1: i32) -> (i32, i32, i32) {
    %c0_i32 = arith.constant 0 : i32
    %c0_i32_0 = arith.constant 0 : i32
    %c0_i32_1 = arith.constant 0 : i32
    return %arg0, %c0_i32, %c0_i32_0 : i32, i32, i32
  }
  func.func @transform_3(%arg0: i32, %arg1: i32) -> (i32, i32, i32) {
    %c0_i32 = arith.constant 0 : i32
    %c0_i32_0 = arith.constant 0 : i32
    return %arg0, %arg1, %c0_i32 : i32, i32, i32
  }
  func.func @transform_4(%arg0: i32, %arg1: i32) -> (i32, i32, i32) {
    %c0_i32 = arith.constant 0 : i32
    %c0_i32_0 = arith.constant 0 : i32
    %c0_i32_1 = arith.constant 0 : i32
    return %arg0, %c0_i32, %c0_i32_0 : i32, i32, i32
  }
  func.func @transform_5(%arg0: i32, %arg1: i32) -> (i32, i32) {
    %c0_i32 = arith.constant 0 : i32
    %c0_i32_0 = arith.constant 0 : i32
    %c0_i32_1 = arith.constant 0 : i32
    return %c0_i32, %c0_i32_0 : i32, i32
  }
  func.func @transform_6(%arg0: i32, %arg1: i32) -> (i32, i32) {
    %c0_i32 = arith.constant 0 : i32
    %c0_i32_0 = arith.constant 0 : i32
    %c0_i32_1 = arith.constant 0 : i32
    return %c0_i32, %c0_i32_0 : i32, i32
  }
  func.func @transform_7(%arg0: i32, %arg1: i32) -> (i32, i32) {
    %c0_i32 = arith.constant 0 : i32
    %c0_i32_0 = arith.constant 0 : i32
    %c0_i32_1 = arith.constant 0 : i32
    return %c0_i32, %c0_i32_0 : i32, i32
  }
  func.func @transform_8(%arg0: i32, %arg1: i32) -> (i32, i32) {
    %c0_i32 = arith.constant 0 : i32
    %c0_i32_0 = arith.constant 0 : i32
    %c0_i32_1 = arith.constant 0 : i32
    return %c0_i32, %c0_i32_0 : i32, i32
  }
  func.func @transform_9(%arg0: i32, %arg1: i32) -> (i32, i32, i32) {
    %c0_i32 = arith.constant 0 : i32
    %c0_i32_0 = arith.constant 0 : i32
    %c0_i32_1 = arith.constant 0 : i32
    %c0_i32_2 = arith.constant 0 : i32
    return %c0_i32, %c0_i32_0, %c0_i32_1 : i32, i32, i32
  }
  func.func @transform_10(%arg0: i32, %arg1: i32) -> (i32, i32, i32) {
    %c0_i32 = arith.constant 0 : i32
    %c0_i32_0 = arith.constant 0 : i32
    return %arg0, %arg1, %c0_i32 : i32, i32, i32
  }
}

</mosaic_0001>

<llo_original>
// kernel: tpu_custom_call.1
$region0: #{tpu_custom_call.1}
  #allocation0 [shape = 'u32[]', space=smem, size = 0x4, offset = 0x4, fixed_abs, tag = 'smem constant byte address 0x4 - core index']
  #allocation1 [shape = 'u32[72,128]{1,0:T(1,128)}', space=vmem, size = 0x9000, scoped, tag = 'internal scratch']
  %s0 = inlined_call_operand.hbm [shape: f32[4], index: 0, kind: input, shape index: {}]
  %s1 = inlined_call_operand.hbm [shape: f32[4], index: 1, kind: input, shape index: {}]
  %s2 = inlined_call_operand.hbm [shape: f32[2,16,32], index: 2, kind: input, shape index: {}]
  %s3 = inlined_call_operand.hbm [shape: bf16[2,16,16], index: 3, kind: input, shape index: {}]
  %s4 = inlined_call_operand.vmem [shape: f32[2,1,16], index: 4, kind: input, shape index: {}]
  %s5 = inlined_call_operand.hbm [shape: f32[32,32], index: 5, kind: input, shape index: {}]
  %s6 = inlined_call_operand.vmem [shape: f32[1,32], index: 6, kind: input, shape index: {}]
  %s7 = inlined_call_operand.hbm [shape: f32[32,32], index: 7, kind: input, shape index: {}]
  %s8 = inlined_call_operand.hbm [shape: f32[1,32], index: 8, kind: input, shape index: {}]
  %s9 = inlined_call_operand.vmem [shape: f32[4,1,32], index: 9, kind: input, shape index: {}]
  %s10 = inlined_call_operand.hbm [shape: f32[2,16,32], index: 10, kind: output, shape index: {}]
  %s11 = sld [smem:[#allocation0]]
  $region101: #{tpu_custom_call.1} parent=0
    _
  %s13 = ssub.s32 1, %s11
  %s14 = scalar_select 0, %s13, %s11
  $region1: #{tpu_custom_call.1} parent=0
    #allocation2 [shape = 'u8[512]{0}', space=smem, size = 0x200, scoped, tag = 'input window, operand 0, single buffered']
    #allocation3 [shape = 's32[2]{0}', space=sflag, size = 0x8, scoped, tag = 'scoped memory for tpu_custom_call.1']
    #allocation4 [shape = 's32[2]{0}', space=sflag, size = 0x8, scoped, tag = 'scoped memory for tpu_custom_call.1']
    #allocation5 [shape = 's32[2]{0}', space=sflag, size = 0x8, scoped, tag = 'scoped memory for tpu_custom_call.1']
    #allocation6 [shape = 'u8[512]{0}', space=smem, size = 0x200, scoped, tag = 'input window, operand 1, single buffered']
    #allocation7 [shape = 's32[1]{0}', space=sflag, size = 0x4, scoped, tag = 'scoped memory for tpu_custom_call.1']
    #allocation8 [shape = 'u8[16384]{0}', space=vmem, size = 0x4000, scoped, tag = 'input window, operand 2']
    #allocation9 [shape = 'u8[8192]{0}', space=vmem, size = 0x2000, scoped, tag = 'input window, operand 3']
    #allocation10 [shape = 's32[2]{0}', space=sflag, size = 0x8, scoped, tag = 'scoped memory for tpu_custom_call.1']
    #allocation11 [shape = 'u8[16384]{0}', space=vmem, size = 0x4000, scoped, tag = 'input window, operand 5, single buffered']
    #allocation12 [shape = 'u8[16384]{0}', space=vmem, size = 0x4000, scoped, tag = 'input window, operand 7, single buffered']
    #allocation13 [shape = 's32[1]{0}', space=sflag, size = 0x4, scoped, tag = 'scoped memory for tpu_custom_call.1']
    #allocation14 [shape = 'u8[512]{0}', space=vmem, size = 0x400, scoped, tag = 'input window, operand 8, single buffered']
    #allocation15 [shape = 'u8[16384]{0}', space=vmem, size = 0x4000, scoped, tag = 'output window, operand 0']
    %15 = vsyncpa [#allocation5], 0
    %16 = vsyncpa [#allocation7], 0
    %17 = vsyncpa [#allocation3], 0
    %s18 = scalar_lea.sflag [#allocation3], 1
    %19 = vsyncpa %s18, 0
    %20 = vsyncpa [#allocation10], 0
    %s21 = scalar_lea.sflag [#allocation10], 1
    %22 = vsyncpa %s21, 0
    %23 = vsyncpa [#allocation13], 0
    %24 = vsyncpa [#allocation4], 0
    %s25 = scalar_lea.sflag [#allocation4], 1
    %26 = vsyncpa %s25, 0
    loop: start=0, step=1, limit=4
    $region2: #{tpu_custom_call.1} parent=1 // loop_pre_header
      _
    $region3: #{tpu_custom_call.1} parent=1 // loop_header
      %s28 = sphi 0, %s32
      %p29 = scmp.ge.s32.totalorder %s28, 4
      %s35 = sphi 0, %s47
      %s36 = sphi 0, %s43
      %s37 = sphi 0, %s35
      %s38 = sphi 0, %s36
      %s39 = sphi 0, %s37
      %s40 = sphi 0, %s38
      %s48 = sphi 0, %s48
      %s50 = sphi 0, %s48
      %s51 = sphi 0, %s50
      %s65 = sphi 0, %s51
      %s69 = sphi 0, %s69
      %s71 = sphi 0, %s69
      %s72 = sphi 0, %s71
      %s86 = sphi 0, %s72
      %s92 = sphi 0, %s94
      %s95 = sphi 0, %s92
      %s96 = sphi 0, %s95
      %s112 = sphi 0, %s96
      %s120 = sphi 0, %s122
      %s123 = sphi 0, %s120
      %s124 = sphi 0, %s123
      %s140 = sphi 0, %s124
      %s146 = sphi 0, %s148
      %s149 = sphi 0, %s146
      %s150 = sphi 0, %s149
      %s166 = sphi 0, %s150
      %s170 = sphi 0, %s170
      %s172 = sphi 0, %s170
      %s173 = sphi 0, %s172
      %s187 = sphi 0, %s173
      %s191 = sphi 0, %s191
      %s193 = sphi 0, %s191
      %s194 = sphi 0, %s193
      %s208 = sphi 0, %s194
      %s212 = sphi 0, %s212
      %s214 = sphi 0, %s212
      %s215 = sphi 0, %s214
      %s229 = sphi 0, %s215
      %s233 = sphi 0, %s233
      %s235 = sphi 0, %s233
      %s236 = sphi 0, %s235
      %s250 = sphi 0, %s236
      %s254 = sphi 0, %s254
      %s256 = sphi 0, %s254
      %s257 = sphi 0, %s256
      %s271 = sphi 0, %s257
      %s279 = sphi 0, %s281
      %s282 = sphi 0, %s279
      %s283 = sphi 0, %s282
      %s299 = sphi 0, %s283
    $region4: #{tpu_custom_call.1} parent=1 // loop_header_branch
      %31 = sbr.rel (%p29) target = $region8
    $region5: #{tpu_custom_call.1} parent=1 // loop_body
      %s33 = ssub.s32 %s28, 1
      %s34 = ssub.s32 %s28, 2
      %s41 = sadd.s32 1, %s36
      %p42 = scmp.ge.s32.totalorder %s41, 1
      %s43 = scalar_select %p42, 0, %s41
      %s44 = sadd.s32 1, %s35
      %s45 = scalar_select %p42, %s44, %s35
      %p46 = scmp.ge.s32.totalorder %s45, 2
      %s47 = scalar_select %p46, 0, %s45
      %s49 = sadd.s32 %s48, 1
      %p52 = scmp.eq.s32.totalorder %s28, 1
      %p53 = scmp.ne.s32.totalorder %s48, %s50
      %p54 = scmp.eq.s32.totalorder %s28, 0
      %p55 = por %p53, %p54
      %p56 = scmp.ne.s32.totalorder %s48, %s50
      %p57 = scmp.eq.s32.totalorder %s33, 1
      %p58 = por %p56, %p57
      %p59 = scmp.ne.s32.totalorder %s50, %s51
      %p60 = scmp.eq.s32.totalorder %s33, 0
      %p61 = por %p59, %p60
      %p62 = scmp.ne.s32.totalorder %s50, %s51
      %p63 = scmp.eq.s32.totalorder %s34, 1
      %p64 = por %p62, %p63
      %p66 = scmp.ne.s32.totalorder %s51, %s65
      %p67 = scmp.eq.s32.totalorder %s34, 0
      %p68 = por %p66, %p67
      %s70 = sadd.s32 %s69, 1
      %p73 = scmp.eq.s32.totalorder %s28, 1
      %p74 = scmp.ne.s32.totalorder %s69, %s71
      %p75 = scmp.eq.s32.totalorder %s28, 0
      %p76 = por %p74, %p75
      %p77 = scmp.ne.s32.totalorder %s69, %s71
      %p78 = scmp.eq.s32.totalorder %s33, 1
      %p79 = por %p77, %p78
      %p80 = scmp.ne.s32.totalorder %s71, %s72
      %p81 = scmp.eq.s32.totalorder %s33, 0
      %p82 = por %p80, %p81
      %p83 = scmp.ne.s32.totalorder %s71, %s72
      %p84 = scmp.eq.s32.totalorder %s34, 1
      %p85 = por %p83, %p84
      %p87 = scmp.ne.s32.totalorder %s72, %s86
      %p88 = scmp.eq.s32.totalorder %s34, 0
      %p89 = por %p87, %p88
      %s90 = ssub.s32 %s35, %s47
      %p91 = scmp.eq.s32.totalorder %s90, 0
      %s93 = sadd.s32 %s92, 1
      %s94 = scalar_select %p91, %s92, %s93
      %p97 = pneg %p91
      %p98 = scmp.eq.s32.totalorder %s28, 1
      %p99 = por %p97, %p98
      %p100 = scmp.ne.s32.totalorder %s92, %s95
      %p101 = scmp.eq.s32.totalorder %s28, 0
      %p102 = por %p100, %p101
      %p103 = scmp.ne.s32.totalorder %s92, %s95
      %p104 = scmp.eq.s32.totalorder %s33, 1
      %p105 = por %p103, %p104
      %p106 = scmp.ne.s32.totalorder %s95, %s96
      %p107 = scmp.eq.s32.totalorder %s33, 0
      %p108 = por %p106, %p107
      %p109 = scmp.ne.s32.totalorder %s95, %s96
      %p110 = scmp.eq.s32.totalorder %s34, 1
      %p111 = por %p109, %p110
      %p113 = scmp.ne.s32.totalorder %s96, %s112
      %p114 = scmp.eq.s32.totalorder %s34, 0
      %p115 = por %p113, %p114
      %s116 = ssub.s32 %s35, %s47
      %s117 = ssub.s32 %s36, %s43
      %s118 = sor.u32 %s116, %s117
      %p119 = scmp.eq.s32.totalorder %s118, 0
      %s121 = sadd.s32 %s120, 1
      %s122 = scalar_select %p119, %s120, %s121
      %p125 = pneg %p119
      %p126 = scmp.eq.s32.totalorder %s28, 1
      %p127 = por %p125, %p126
      %p128 = scmp.ne.s32.totalorder %s120, %s123
      %p129 = scmp.eq.s32.totalorder %s28, 0
      %p130 = por %p128, %p129
      %p131 = scmp.ne.s32.totalorder %s120, %s123
      %p132 = scmp.eq.s32.totalorder %s33, 1
      %p133 = por %p131, %p132
      %p134 = scmp.ne.s32.totalorder %s123, %s124
      %p135 = scmp.eq.s32.totalorder %s33, 0
      %p136 = por %p134, %p135
      %p137 = scmp.ne.s32.totalorder %s123, %s124
      %p138 = scmp.eq.s32.totalorder %s34, 1
      %p139 = por %p137, %p138
      %p141 = scmp.ne.s32.totalorder %s124, %s140
      %p142 = scmp.eq.s32.totalorder %s34, 0
      %p143 = por %p141, %p142
      %s144 = ssub.s32 %s35, %s47
      %p145 = scmp.eq.s32.totalorder %s144, 0
      %s147 = sadd.s32 %s146, 1
      %s148 = scalar_select %p145, %s146, %s147
      %p151 = pneg %p145
      %p152 = scmp.eq.s32.totalorder %s28, 1
      %p153 = por %p151, %p152
      %p154 = scmp.ne.s32.totalorder %s146, %s149
      %p155 = scmp.eq.s32.totalorder %s28, 0
      %p156 = por %p154, %p155
      %p157 = scmp.ne.s32.totalorder %s146, %s149
      %p158 = scmp.eq.s32.totalorder %s33, 1
      %p159 = por %p157, %p158
      %p160 = scmp.ne.s32.totalorder %s149, %s150
      %p161 = scmp.eq.s32.totalorder %s33, 0
      %p162 = por %p160, %p161
      %p163 = scmp.ne.s32.totalorder %s149, %s150
      %p164 = scmp.eq.s32.totalorder %s34, 1
      %p165 = por %p163, %p164
      %p167 = scmp.ne.s32.totalorder %s150, %s166
      %p168 = scmp.eq.s32.totalorder %s34, 0
      %p169 = por %p167, %p168
      %s171 = sadd.s32 %s170, 1
      %p174 = scmp.eq.s32.totalorder %s28, 1
      %p175 = scmp.ne.s32.totalorder %s170, %s172
      %p176 = scmp.eq.s32.totalorder %s28, 0
      %p177 = por %p175, %p176
      %p178 = scmp.ne.s32.totalorder %s170, %s172
      %p179 = scmp.eq.s32.totalorder %s33, 1
      %p180 = por %p178, %p179
      %p181 = scmp.ne.s32.totalorder %s172, %s173
      %p182 = scmp.eq.s32.totalorder %s33, 0
      %p183 = por %p181, %p182
      %p184 = scmp.ne.s32.totalorder %s172, %s173
      %p185 = scmp.eq.s32.totalorder %s34, 1
      %p186 = por %p184, %p185
      %p188 = scmp.ne.s32.totalorder %s173, %s187
      %p189 = scmp.eq.s32.totalorder %s34, 0
      %p190 = por %p188, %p189
      %s192 = sadd.s32 %s191, 1
      %p195 = scmp.eq.s32.totalorder %s28, 1
      %p196 = scmp.ne.s32.totalorder %s191, %s193
      %p197 = scmp.eq.s32.totalorder %s28, 0
      %p198 = por %p196, %p197
      %p199 = scmp.ne.s32.totalorder %s191, %s193
      %p200 = scmp.eq.s32.totalorder %s33, 1
      %p201 = por %p199, %p200
      %p202 = scmp.ne.s32.totalorder %s193, %s194
      %p203 = scmp.eq.s32.totalorder %s33, 0
      %p204 = por %p202, %p203
      %p205 = scmp.ne.s32.totalorder %s193, %s194
      %p206 = scmp.eq.s32.totalorder %s34, 1
      %p207 = por %p205, %p206
      %p209 = scmp.ne.s32.totalorder %s194, %s208
      %p210 = scmp.eq.s32.totalorder %s34, 0
      %p211 = por %p209, %p210
      %s213 = sadd.s32 %s212, 1
      %p216 = scmp.eq.s32.totalorder %s28, 1
      %p217 = scmp.ne.s32.totalorder %s212, %s214
      %p218 = scmp.eq.s32.totalorder %s28, 0
      %p219 = por %p217, %p218
      %p220 = scmp.ne.s32.totalorder %s212, %s214
      %p221 = scmp.eq.s32.totalorder %s33, 1
      %p222 = por %p220, %p221
      %p223 = scmp.ne.s32.totalorder %s214, %s215
      %p224 = scmp.eq.s32.totalorder %s33, 0
      %p225 = por %p223, %p224
      %p226 = scmp.ne.s32.totalorder %s214, %s215
      %p227 = scmp.eq.s32.totalorder %s34, 1
      %p228 = por %p226, %p227
      %p230 = scmp.ne.s32.totalorder %s215, %s229
      %p231 = scmp.eq.s32.totalorder %s34, 0
      %p232 = por %p230, %p231
      %s234 = sadd.s32 %s233, 1
      %p237 = scmp.eq.s32.totalorder %s28, 1
      %p238 = scmp.ne.s32.totalorder %s233, %s235
      %p239 = scmp.eq.s32.totalorder %s28, 0
      %p240 = por %p238, %p239
      %p241 = scmp.ne.s32.totalorder %s233, %s235
      %p242 = scmp.eq.s32.totalorder %s33, 1
      %p243 = por %p241, %p242
      %p244 = scmp.ne.s32.totalorder %s235, %s236
      %p245 = scmp.eq.s32.totalorder %s33, 0
      %p246 = por %p244, %p245
      %p247 = scmp.ne.s32.totalorder %s235, %s236
      %p248 = scmp.eq.s32.totalorder %s34, 1
      %p249 = por %p247, %p248
      %p251 = scmp.ne.s32.totalorder %s236, %s250
      %p252 = scmp.eq.s32.totalorder %s34, 0
      %p253 = por %p251, %p252
      %s255 = sadd.s32 %s254, 1
      %p258 = scmp.eq.s32.totalorder %s28, 1
      %p259 = scmp.ne.s32.totalorder %s254, %s256
      %p260 = scmp.eq.s32.totalorder %s28, 0
      %p261 = por %p259, %p260
      %p262 = scmp.ne.s32.totalorder %s254, %s256
      %p263 = scmp.eq.s32.totalorder %s33, 1
      %p264 = por %p262, %p263
      %p265 = scmp.ne.s32.totalorder %s256, %s257
      %p266 = scmp.eq.s32.totalorder %s33, 0
      %p267 = por %p265, %p266
      %p268 = scmp.ne.s32.totalorder %s256, %s257
      %p269 = scmp.eq.s32.totalorder %s34, 1
      %p270 = por %p268, %p269
      %p272 = scmp.ne.s32.totalorder %s257, %s271
      %p273 = scmp.eq.s32.totalorder %s34, 0
      %p274 = por %p272, %p273
      %s275 = ssub.s32 %s35, %s47
      %s276 = ssub.s32 %s36, %s43
      %s277 = sor.u32 %s275, %s276
      %p278 = scmp.eq.s32.totalorder %s277, 0
      %s280 = sadd.s32 %s279, 1
      %s281 = scalar_select %p278, %s279, %s280
      %p284 = pneg %p278
      %p285 = scmp.eq.s32.totalorder %s28, 1
      %p286 = por %p284, %p285
      %p287 = scmp.ne.s32.totalorder %s279, %s282
      %p288 = scmp.eq.s32.totalorder %s28, 0
      %p289 = por %p287, %p288
      %p290 = scmp.ne.s32.totalorder %s279, %s282
      %p291 = scmp.eq.s32.totalorder %s33, 1
      %p292 = por %p290, %p291
      %p293 = scmp.ne.s32.totalorder %s282, %s283
      %p294 = scmp.eq.s32.totalorder %s33, 0
      %p295 = por %p293, %p294
      %p296 = scmp.ne.s32.totalorder %s282, %s283
      %p297 = scmp.eq.s32.totalorder %s34, 1
      %p298 = por %p296, %p297
      %p300 = scmp.ne.s32.totalorder %s283, %s299
      %p301 = scmp.eq.s32.totalorder %s34, 0
      %p302 = por %p300, %p301
      %p303 = scmp.le.s32.totalorder 1, %s28
      %p304 = scmp.lt.s32.totalorder %s28, 3
      %p305 = pnand %p303, %p304
      %p306 = pneg %p305
      // Predicated region
      $region9: #{tpu_custom_call.1} parent=5 // pred_check
        _
      $region10: #{tpu_custom_call.1} parent=5 // pred_check_branch
        %308 = sbr.rel (%p305) target = $region12
      $region11: #{tpu_custom_call.1} parent=5 // pred_region
        %s309 = ssub.s32 %s28, 1
        // Predicated region
        $region13: #{tpu_custom_call.1} parent=11 // pred_check
          %p310 = pneg %p61
        $region14: #{tpu_custom_call.1} parent=11 // pred_check_branch
          %312 = sbr.rel (%p310) target = $region16
        $region15: #{tpu_custom_call.1} parent=11 // pred_region
          %314 = vsyncadd [#allocation5], 0
          %s316 = sshll.u32 %s0, 4
          %s317 = int_to_ptr.hbm [resolvable:$true] %s316
          %319 = dma.hbm_to_smem %s317, 16, [#allocation2], [#allocation5]
        $region16: #{tpu_custom_call.1} parent=11 // pred_fallthru
          _
        // Predicated region
        $region17: #{tpu_custom_call.1} parent=11 // pred_check
          %p320 = pneg %p82
        $region18: #{tpu_custom_call.1} parent=11 // pred_check_branch
          %322 = sbr.rel (%p320) target = $region20
        $region19: #{tpu_custom_call.1} parent=11 // pred_region
          %324 = vsyncadd [#allocation7], 0
          %s326 = sshll.u32 %s1, 4
          %s327 = int_to_ptr.hbm [resolvable:$true] %s326
          %329 = dma.hbm_to_smem %s327, 16, [#allocation6], [#allocation7]
        $region20: #{tpu_custom_call.1} parent=11 // pred_fallthru
          _
        // Predicated region
        $region21: #{tpu_custom_call.1} parent=11 // pred_check
          %p330 = pneg %p183
        $region22: #{tpu_custom_call.1} parent=11 // pred_check_branch
          %332 = sbr.rel (%p330) target = $region24
        $region23: #{tpu_custom_call.1} parent=11 // pred_region
          %334 = vsyncadd [#allocation10], 0
          %s335 = sshll.u32 %s5, 4
          %s336 = int_to_ptr.hbm [resolvable:$true] %s335
          %s337 = sshll.u32 [#allocation11], 4
          %s338 = int_to_ptr.vmem [resolvable:$true] %s337
          %343 = dma.hbm_to_vmem [thread:$0]  %s336, 512, %s338, [#allocation10], 128, 128, 8
        $region24: #{tpu_custom_call.1} parent=11 // pred_fallthru
          _
        // Predicated region
        $region25: #{tpu_custom_call.1} parent=11 // pred_check
          %p344 = pneg %p204
        $region26: #{tpu_custom_call.1} parent=11 // pred_check_branch
          %346 = sbr.rel (%p344) target = $region28
        $region27: #{tpu_custom_call.1} parent=11 // pred_region
          _
        $region28: #{tpu_custom_call.1} parent=11 // pred_fallthru
          _
        // Predicated region
        $region29: #{tpu_custom_call.1} parent=11 // pred_check
          %p347 = pneg %p225
        $region30: #{tpu_custom_call.1} parent=11 // pred_check_branch
          %349 = sbr.rel (%p347) target = $region32
        $region31: #{tpu_custom_call.1} parent=11 // pred_region
          %351 = vsyncadd [#allocation13], 0
          %s352 = sshll.u32 %s7, 4
          %s353 = int_to_ptr.hbm [resolvable:$true] %s352
          %s354 = sshll.u32 [#allocation12], 4
          %s355 = int_to_ptr.vmem [resolvable:$true] %s354
          %360 = dma.hbm_to_vmem [thread:$0]  %s353, 512, %s355, [#allocation13], 128, 128, 8
        $region32: #{tpu_custom_call.1} parent=11 // pred_fallthru
          _
        // Predicated region
        $region33: #{tpu_custom_call.1} parent=11 // pred_check
          %p361 = pneg %p246
        $region34: #{tpu_custom_call.1} parent=11 // pred_check_branch
          %363 = sbr.rel (%p361) target = $region36
        $region35: #{tpu_custom_call.1} parent=11 // pred_region
          %365 = vsyncadd [#allocation13], 0
          %s367 = sshll.u32 %s8, 4
          %s368 = int_to_ptr.hbm [resolvable:$true] %s367
          %s369 = sshll.u32 [#allocation14], 4
          %s370 = int_to_ptr.vmem [resolvable:$true] %s369
          %372 = dma.hbm_to_vmem [thread:$0]  %s368, 16, %s370, [#allocation13]
        $region36: #{tpu_custom_call.1} parent=11 // pred_fallthru
          _
        // Predicated region
        $region37: #{tpu_custom_call.1} parent=11 // pred_check
          %p373 = pneg %p267
        $region38: #{tpu_custom_call.1} parent=11 // pred_check_branch
          %375 = sbr.rel (%p373) target = $region40
        $region39: #{tpu_custom_call.1} parent=11 // pred_region
          _
        $region40: #{tpu_custom_call.1} parent=11 // pred_fallthru
          _
      $region12: #{tpu_custom_call.1} parent=5 // pred_fallthru
        _
      %p376 = scmp.lt.s32.totalorder %s28, 2
      // Predicated region
      $region41: #{tpu_custom_call.1} parent=5 // pred_check
        %p377 = pneg %p376
      $region42: #{tpu_custom_call.1} parent=5 // pred_check_branch
        %379 = sbr.rel (%p377) target = $region44
      $region43: #{tpu_custom_call.1} parent=5 // pred_region
        // Predicated region
        $region45: #{tpu_custom_call.1} parent=43 // pred_check
          %p380 = pneg %p102
        $region46: #{tpu_custom_call.1} parent=43 // pred_check_branch
          %382 = sbr.rel (%p380) target = $region48
        $region47: #{tpu_custom_call.1} parent=43 // pred_region
          %s383 = sand.u32 %s92, 1
          %s384 = scalar_lea.sflag [#allocation3], %s383
          %s385 = sand.u32 %s92, 1
          %s386 = smul.addr %s385, 16
          %s387 = scalar_lea.vmem [#allocation8], %s386
          %389 = vsyncadd %s384, 0
          %s390 = smul.addr %s35, 2
          %s391 = smul.addr %s390, 8
          %s392 = scalar_lea.hbm %s2, %s391
          %s393 = sshll.u32 %s392, 4
          %s394 = int_to_ptr.hbm [resolvable:$true] %s393
          %s395 = sshll.u32 %s387, 4
          %s396 = int_to_ptr.vmem [resolvable:$true] %s395
          %401 = dma.hbm_to_vmem [thread:$0]  %s394, 256, %s396, %s384, 128, 128, 8
        $region48: #{tpu_custom_call.1} parent=43 // pred_fallthru
          _
        // Predicated region
        $region49: #{tpu_custom_call.1} parent=43 // pred_check
          %p402 = pneg %p130
        $region50: #{tpu_custom_call.1} parent=43 // pred_check_branch
          %404 = sbr.rel (%p402) target = $region52
        $region51: #{tpu_custom_call.1} parent=43 // pred_region
          %s405 = sand.u32 %s28, 1
          %s406 = scalar_lea.sflag [#allocation10], %s405
          %s407 = sand.u32 %s120, 1
          %s408 = smul.addr %s407, 8
          %s409 = scalar_lea.vmem [#allocation9], %s408
          %s410 = smul.u32 2, %s36
          %412 = vsyncadd %s406, 0
          %s413 = smul.addr %s35, 2
          %s414 = sadd.s32 %s410, %s413
          %s415 = smul.addr %s414, 4
          %s416 = scalar_lea.hbm %s3, %s415
          %s417 = sshll.u32 %s416, 4
          %s418 = int_to_ptr.hbm [resolvable:$true] %s417
          %s419 = sshll.u32 %s409, 4
          %s420 = int_to_ptr.vmem [resolvable:$true] %s419
          %425 = dma.hbm_to_vmem [thread:$0]  %s418, 128, %s420, %s406, 64, 64, 4
        $region52: #{tpu_custom_call.1} parent=43 // pred_fallthru
          _
        // Predicated region
        $region53: #{tpu_custom_call.1} parent=43 // pred_check
          %p426 = pneg %p156
        $region54: #{tpu_custom_call.1} parent=43 // pred_check_branch
          %428 = sbr.rel (%p426) target = $region56
        $region55: #{tpu_custom_call.1} parent=43 // pred_region
          %p429 = scmp.lt.s32.totalorder %s35, 1
          %s430 = scalar_select %p429, %s35, 1
          %s431 = scalar_lea.vmem %s4, %s430
        $region56: #{tpu_custom_call.1} parent=43 // pred_fallthru
          _
      $region44: #{tpu_custom_call.1} parent=5 // pred_fallthru
        _
      %p432 = scmp.le.s32.totalorder 1, %s28
      %p433 = scmp.lt.s32.totalorder %s28, 3
      %p434 = pnand %p432, %p433
      %p435 = pneg %p434
      // Predicated region
      $region57: #{tpu_custom_call.1} parent=5 // pred_check
        _
      $region58: #{tpu_custom_call.1} parent=5 // pred_check_branch
        %437 = sbr.rel (%p434) target = $region60
      $region59: #{tpu_custom_call.1} parent=5 // pred_region
        %s438 = ssub.s32 %s28, 1
        // Predicated region
        $region61: #{tpu_custom_call.1} parent=59 // pred_check
          %p439 = pneg %p61
        $region62: #{tpu_custom_call.1} parent=59 // pred_check_branch
          %441 = sbr.rel (%p439) target = $region64
        $region63: #{tpu_custom_call.1} parent=59 // pred_region
          %443 = dma.done [#allocation5], 16
        $region64: #{tpu_custom_call.1} parent=59 // pred_fallthru
          _
        // Predicated region
        $region65: #{tpu_custom_call.1} parent=59 // pred_check
          %p444 = pneg %p82
        $region66: #{tpu_custom_call.1} parent=59 // pred_check_branch
          %446 = sbr.rel (%p444) target = $region68
        $region67: #{tpu_custom_call.1} parent=59 // pred_region
          %448 = dma.done [#allocation7], 16
        $region68: #{tpu_custom_call.1} parent=59 // pred_fallthru
          _
        %s449 = sand.u32 %s95, 1
        %s450 = scalar_lea.sflag [#allocation3], %s449
        %s451 = sand.u32 %s95, 1
        %s452 = smul.addr %s451, 16
        %s453 = scalar_lea.vmem [#allocation8], %s452
        // Predicated region
        $region69: #{tpu_custom_call.1} parent=59 // pred_check
          %p454 = pneg %p108
        $region70: #{tpu_custom_call.1} parent=59 // pred_check_branch
          %456 = sbr.rel (%p454) target = $region72
        $region71: #{tpu_custom_call.1} parent=59 // pred_region
          %458 = dma.done %s450, 256
        $region72: #{tpu_custom_call.1} parent=59 // pred_fallthru
          _
        %s459 = sand.u32 %s33, 1
        %s460 = scalar_lea.sflag [#allocation10], %s459
        %s461 = sand.u32 %s123, 1
        %s462 = smul.addr %s461, 8
        %s463 = scalar_lea.vmem [#allocation9], %s462
        // Predicated region
        $region73: #{tpu_custom_call.1} parent=59 // pred_check
          %p464 = pneg %p136
        $region74: #{tpu_custom_call.1} parent=59 // pred_check_branch
          %466 = sbr.rel (%p464) target = $region76
        $region75: #{tpu_custom_call.1} parent=59 // pred_region
          %468 = dma.done %s460, 128
        $region76: #{tpu_custom_call.1} parent=59 // pred_fallthru
          _
        // Predicated region
        $region77: #{tpu_custom_call.1} parent=59 // pred_check
          %p469 = pneg %p183
        $region78: #{tpu_custom_call.1} parent=59 // pred_check_branch
          %471 = sbr.rel (%p469) target = $region80
        $region79: #{tpu_custom_call.1} parent=59 // pred_region
          %473 = dma.done [#allocation10], 512
        $region80: #{tpu_custom_call.1} parent=59 // pred_fallthru
          _
        // Predicated region
        $region81: #{tpu_custom_call.1} parent=59 // pred_check
          %p474 = pneg %p225
        $region82: #{tpu_custom_call.1} parent=59 // pred_check_branch
          %476 = sbr.rel (%p474) target = $region84
        $region83: #{tpu_custom_call.1} parent=59 // pred_region
          %478 = dma.done [#allocation13], 512
        $region84: #{tpu_custom_call.1} parent=59 // pred_fallthru
          _
        // Predicated region
        $region85: #{tpu_custom_call.1} parent=59 // pred_check
          %p479 = pneg %p246
        $region86: #{tpu_custom_call.1} parent=59 // pred_check_branch
          %481 = sbr.rel (%p479) target = $region88
        $region87: #{tpu_custom_call.1} parent=59 // pred_region
          %483 = dma.done [#allocation13], 16
        $region88: #{tpu_custom_call.1} parent=59 // pred_fallthru
          _
        %484 = sfence
        %p485 = pneg %p61
        %p486 = pneg %p58
        %p487 = pneg %p82
        %p488 = pneg %p79
        %s489 = sand.u32 %s95, 1
        %s490 = scalar_lea.sflag [#allocation3], %s489
        %s491 = sand.u32 %s95, 1
        %s492 = smul.addr %s491, 16
        %s493 = scalar_lea.vmem [#allocation8], %s492
        %p494 = pneg %p108
        %p495 = pneg %p105
        %s496 = sand.u32 %s33, 1
        %s497 = scalar_lea.sflag [#allocation10], %s496
        %s498 = sand.u32 %s123, 1
        %s499 = smul.addr %s498, 8
        %s500 = scalar_lea.vmem [#allocation9], %s499
        %p501 = pneg %p136
        %p502 = pneg %p133
        %p503 = scmp.lt.s32.totalorder %s37, 1
        %s504 = scalar_select %p503, %s37, 1
        %s505 = scalar_lea.vmem %s4, %s504
        %p506 = pneg %p162
        %p507 = pneg %p159
        %p508 = pneg %p183
        %p509 = pneg %p180
        %p510 = pneg %p204
        %p511 = pneg %p201
        %p512 = pneg %p225
        %p513 = pneg %p222
        %p514 = pneg %p246
        %p515 = pneg %p243
        %p516 = pneg %p267
        %p517 = pneg %p264
        %p518 = pneg %p295
        %p519 = pneg %p292
        %s520 = sand.u32 %s282, 1
        %s521 = scalar_lea.sflag [#allocation4], %s520
        %s522 = sand.u32 %s282, 1
        %s523 = smul.addr %s522, 16
        %s524 = scalar_lea.vmem [#allocation15], %s523
        %s525 = smul.u32 2, %s38
        %p526 = scmp.lt.s32.totalorder %s37, 1
        %s527 = scalar_select %p526, %s37, 1
        %s528 = scalar_lea.vmem %s4, %s527
        %s529 = smul.u32 2, %s38
        %v531 = vld [vmem:[%s453] sm:$0xff]
        %v532 = vld [vmem:[%s453 + $0x8] sm:$0xff]
        %v533 = vpack.c.bf16 %v532, %v531
        %v534 = vld [vmem:[#allocation11] sm:$0xff]
        %v535 = vld [vmem:[#allocation11 + $0x8] sm:$0xff]
        %v536 = vld [vmem:[#allocation11 + $0x10] sm:$0xff]
        %v537 = vld [vmem:[#allocation11 + $0x18] sm:$0xff]
        %v538 = vpack.c.bf16 %v535, %v534
        %v539 = vpack.c.bf16 %v537, %v536
        %v540 = vld [vmem:[%s6] sm:$0x1]
        %v542 = vperm.slane %v540, 0
        %vm544 = vcmask 261120
        %v546 = vsel %vm544, %v533, 0
        %548 = vmatpush.bf16.msra.mxu0 0
        %549 = vmatpush.bf16.msra.mxu0 0
        %550 = vmatpush.bf16.msra.mxu0 0
        %551 = vmatpush.bf16.msra.mxu0 0
        %552 = vmatpush.bf16.msra.mxu0 0
        %553 = vmatpush.bf16.msra.mxu0 0
        %554 = vmatpush.bf16.msra.mxu0 %v539
        %555 = vmatpush.bf16.msra.mxu0 %v538
        %556 = vmatmul.bf16.gmra.mxu0 %v546
        %v557 = vpop.f32.mrf.mxu0
        %v558 = vadd.f32 %v542, %v557
        %v559 = vpop.f32.mrf.mxu0
        %v560 = vadd.f32 %v542, %v559
        %561 = vdwg.mxu0
        %v562 = vld [vmem:[%s528] sm:$0x1]
        %vm563 = vcmp.gt.f32.partialorder %v562, 0.0
        %v564 = vsel %vm563, 0.0, -1e+09
        %v565 = vld [vmem:[%s463] sm:$0xf]
        %v566 = vld [vmem:[%s463 + $0x4] sm:$0xf]
        %v567 = vunpack.c.l.bf16 %v565
        %v568 = vunpack.c.l.bf16 %v566
        %s569 = sld [smem:[#allocation2]]
        %v570 = vstv %s569
        %v571 = vmul.f32 %v567, %v570
        %v572 = vmul.f32 %v568, %v570
        %s573 = sld [smem:[#allocation6]]
        %v574 = vstv %s573
        %v575 = vadd.f32 %v574, %v564
        %v577 = vperm.slane %v575, 0
        %v579 = vadd.f32 %v571, %v577
        %v580 = vadd.f32 %v572, %v577
        %vm581 = vcmask 130048
        %v582 = vsel %vm581, %v579, -inf
        %583 = vmax.xlane.f32.xlu0 %v582
        %v584 = vpop.xlane.xlu0 %583
        %v585 = vsel %vm581, %v580, -inf
        %586 = vmax.xlane.f32.xlu0 %v585
        %v587 = vpop.xlane.xlu0 %586
        %v588 = vsub.f32 %v579, %v584
        %v589 = vsub.f32 %v580, %v587
        %v590 = vmul.f32 %v588, 1.442695
        %v591 = vpow.pop %v590
        %v592 = vmul.f32 %v589, 1.442695
        %v593 = vpow.pop %v592
        %v594 = vsel %vm581, %v591, 0.0
        %595 = vadd.xlane.f32.xlu0 %v594
        %v596 = vpop.xlane.xlu0 %595
        %v597 = vsel %vm581, %v593, 0.0
        %598 = vadd.xlane.f32.xlu0 %v597
        %v599 = vpop.xlane.xlu0 %598
        %v600 = vrcp.pop %v596
        %v601 = vrcp.pop %v599
        %v602 = vmul.f32 %v591, %v600
        %v603 = vmul.f32 %v593, %v601
        %s604 = sld [smem:[#allocation2 + $0x1]]
        %v605 = vstv %s604
        %v606 = vmul.f32 %v567, %v605
        %v607 = vmul.f32 %v568, %v605
        %s608 = sld [smem:[#allocation6 + $0x1]]
        %v609 = vstv %s608
        %v610 = vadd.f32 %v609, %v564
        %v612 = vperm.slane %v610, 0
        %v614 = vadd.f32 %v606, %v612
        %v615 = vadd.f32 %v607, %v612
        %v616 = vsel %vm581, %v614, -inf
        %617 = vmax.xlane.f32.xlu0 %v616
        %v618 = vpop.xlane.xlu0 %617
        %v619 = vsel %vm581, %v615, -inf
        %620 = vmax.xlane.f32.xlu0 %v619
        %v621 = vpop.xlane.xlu0 %620
        %v622 = vsub.f32 %v614, %v618
        %v623 = vsub.f32 %v615, %v621
        %v624 = vmul.f32 %v622, 1.442695
        %v625 = vpow.pop %v624
        %v626 = vmul.f32 %v623, 1.442695
        %v627 = vpow.pop %v626
        %v628 = vsel %vm581, %v625, 0.0
        %629 = vadd.xlane.f32.xlu0 %v628
        %v630 = vpop.xlane.xlu0 %629
        %v631 = vsel %vm581, %v627, 0.0
        %632 = vadd.xlane.f32.xlu0 %v631
        %v633 = vpop.xlane.xlu0 %632
        %v634 = vrcp.pop %v630
        %v635 = vrcp.pop %v633
        %v636 = vmul.f32 %v625, %v634
        %v637 = vmul.f32 %v627, %v635
        %s638 = sld [smem:[#allocation2 + $0x2]]
        %v639 = vstv %s638
        %v640 = vmul.f32 %v567, %v639
        %v641 = vmul.f32 %v568, %v639
        %s642 = sld [smem:[#allocation6 + $0x2]]
        %v643 = vstv %s642
        %v644 = vadd.f32 %v643, %v564
        %v646 = vperm.slane %v644, 0
        %v648 = vadd.f32 %v640, %v646
        %v649 = vadd.f32 %v641, %v646
        %v650 = vsel %vm581, %v648, -inf
        %651 = vmax.xlane.f32.xlu0 %v650
        %v652 = vpop.xlane.xlu0 %651
        %v653 = vsel %vm581, %v649, -inf
        %654 = vmax.xlane.f32.xlu0 %v653
        %v655 = vpop.xlane.xlu0 %654
        %v656 = vsub.f32 %v648, %v652
        %v657 = vsub.f32 %v649, %v655
        %v658 = vmul.f32 %v656, 1.442695
        %v659 = vpow.pop %v658
        %v660 = vmul.f32 %v657, 1.442695
        %v661 = vpow.pop %v660
        %v662 = vsel %vm581, %v659, 0.0
        %663 = vadd.xlane.f32.xlu0 %v662
        %v664 = vpop.xlane.xlu0 %663
        %v665 = vsel %vm581, %v661, 0.0
        %666 = vadd.xlane.f32.xlu0 %v665
        %v667 = vpop.xlane.xlu0 %666
        %v668 = vrcp.pop %v664
        %v669 = vrcp.pop %v667
        %v670 = vmul.f32 %v659, %v668
        %v671 = vmul.f32 %v661, %v669
        %s672 = sld [smem:[#allocation2 + $0x3]]
        %v673 = vstv %s672
        %v674 = vmul.f32 %v567, %v673
        %v675 = vmul.f32 %v568, %v673
        %s676 = sld [smem:[#allocation6 + $0x3]]
        %v677 = vstv %s676
        %v678 = vadd.f32 %v677, %v564
        %v680 = vperm.slane %v678, 0
        %v682 = vadd.f32 %v674, %v680
        %v683 = vadd.f32 %v675, %v680
        %v684 = vsel %vm581, %v682, -inf
        %685 = vmax.xlane.f32.xlu0 %v684
        %v686 = vpop.xlane.xlu0 %685
        %v687 = vsel %vm581, %v683, -inf
        %688 = vmax.xlane.f32.xlu0 %v687
        %v689 = vpop.xlane.xlu0 %688
        %v690 = vsub.f32 %v682, %v686
        %v691 = vsub.f32 %v683, %v689
        %v692 = vmul.f32 %v690, 1.442695
        %v693 = vpow.pop %v692
        %v694 = vmul.f32 %v691, 1.442695
        %v695 = vpow.pop %v694
        %v696 = vsel %vm581, %v693, 0.0
        %697 = vadd.xlane.f32.xlu0 %v696
        %v698 = vpop.xlane.xlu0 %697
        %v699 = vsel %vm581, %v695, 0.0
        %700 = vadd.xlane.f32.xlu0 %v699
        %v701 = vpop.xlane.xlu0 %700
        %v702 = vrcp.pop %v698
        %v703 = vrcp.pop %v701
        %v704 = vmul.f32 %v693, %v702
        %v705 = vmul.f32 %v695, %v703
        %708 = vrot.lane.b32.xlu0 %v636, 16
        %v709 = vpop.permute.xlu0 %708
        %710 = vrot.lane.b32.xlu0 %v637, 16
        %v711 = vpop.permute.xlu0 %710
        %716 = vrot.lane.b32.xlu0 %v670, 32
        %v717 = vpop.permute.xlu0 %716
        %718 = vrot.lane.b32.xlu0 %v671, 32
        %v719 = vpop.permute.xlu0 %718
        %724 = vrot.lane.b32.xlu0 %v704, 48
        %v725 = vpop.permute.xlu0 %724
        %726 = vrot.lane.b32.xlu0 %v705, 48
        %v727 = vpop.permute.xlu0 %726
        %v730 = vsel %vm581, %v602, %v709
        %v731 = vsel %vm581, %v603, %v711
        %v732 = vsel %vm544, %v730, %v717
        %v733 = vsel %vm544, %v731, %v719
        %vm734 = vcmask 392192
        %v735 = vsel %vm734, %v732, %v725
        %v736 = vsel %vm734, %v733, %v727
        %v737 = vpack.c.bf16 %v736, %v735
        %v738 = vld [vmem:[%s9] sm:$0x1]
        %v739 = vld [vmem:[%s9 + $0x1] sm:$0x1]
        %v740 = vld [vmem:[%s9 + $0x2] sm:$0x1]
        %v741 = vld [vmem:[%s9 + $0x3] sm:$0x1]
        %v746 = vperm.slane %v738, 0
        %v747 = vperm.slane %v739, 0
        %v748 = vperm.slane %v740, 0
        %v749 = vperm.slane %v741, 0
        %v754 = vmul.f32 %v558, %v746
        %v755 = vmul.f32 %v560, %v746
        %v756 = vmul.f32 %v558, %v747
        %v757 = vmul.f32 %v560, %v747
        %v758 = vmul.f32 %v558, %v748
        %v759 = vmul.f32 %v560, %v748
        %v760 = vmul.f32 %v558, %v749
        %v761 = vmul.f32 %v560, %v749
        %v762 = vpack.c.bf16 %v755, %v754
        %v763 = vpack.c.bf16 %v757, %v756
        %v764 = vpack.c.bf16 %v759, %v758
        %v765 = vpack.c.bf16 %v761, %v760
        %vm766 = vcmask 523264
        %v768 = vsel %vm766, %v737, 0
        %770 = vmatpush.bf16.msra.mxu0 0
        %771 = vmatpush.bf16.msra.mxu0 0
        %772 = vmatpush.bf16.msra.mxu0 0
        %773 = vmatpush.bf16.msra.mxu0 0
        %774 = vmatpush.bf16.msra.mxu0 %v765
        %775 = vmatpush.bf16.msra.mxu0 %v764
        %776 = vmatpush.bf16.msra.mxu0 %v763
        %777 = vmatpush.bf16.msra.mxu0 %v762
        %778 = vmatmul.bf16.gmra.mxu0 %v768
        %v779 = vpop.f32.mrf.mxu0
        %v780 = vadd.f32 0.0, %v779
        %v781 = vpop.f32.mrf.mxu0
        %v782 = vadd.f32 0.0, %v781
        %783 = vdwg.mxu0
        %v784 = vpack.c.bf16 %v782, %v780
        %v785 = vld [vmem:[#allocation12] sm:$0xff]
        %v786 = vld [vmem:[#allocation12 + $0x8] sm:$0xff]
        %v787 = vld [vmem:[#allocation12 + $0x10] sm:$0xff]
        %v788 = vld [vmem:[#allocation12 + $0x18] sm:$0xff]
        %v789 = vpack.c.bf16 %v786, %v785
        %v790 = vpack.c.bf16 %v788, %v787
        %v791 = vld [vmem:[#allocation14] sm:$0x1]
        %v793 = vperm.slane %v791, 0
        %v796 = vsel %vm544, %v784, 0
        %798 = vmatpush.bf16.msra.mxu0 0
        %799 = vmatpush.bf16.msra.mxu0 0
        %800 = vmatpush.bf16.msra.mxu0 0
        %801 = vmatpush.bf16.msra.mxu0 0
        %802 = vmatpush.bf16.msra.mxu0 0
        %803 = vmatpush.bf16.msra.mxu0 0
        %804 = vmatpush.bf16.msra.mxu0 %v790
        %805 = vmatpush.bf16.msra.mxu0 %v789
        %806 = vmatmul.bf16.gmra.mxu0 %v796
        %v807 = vpop.f32.mrf.mxu0
        %v808 = vadd.f32 %v793, %v807
        %v809 = vpop.f32.mrf.mxu0
        %v810 = vadd.f32 %v793, %v809
        %811 = vdwg.mxu0
        %812 = vst.msk [vmem:[%s524] sm:$0xff] %vm544, %v808
        %813 = vst.msk [vmem:[%s524 + $0x8] sm:$0xff] %vm544, %v810
        %s814 = sand.u32 %s282, 1
        %s815 = scalar_lea.sflag [#allocation4], %s814
        %s816 = sand.u32 %s282, 1
        %s817 = smul.addr %s816, 16
        %s818 = scalar_lea.vmem [#allocation15], %s817
        // Predicated region
        $region89: #{tpu_custom_call.1} parent=59 // pred_check
          %p819 = pneg %p292
        $region90: #{tpu_custom_call.1} parent=59 // pred_check_branch
          %821 = sbr.rel (%p819) target = $region92
        $region91: #{tpu_custom_call.1} parent=59 // pred_region
          %s822 = smul.u32 2, %s38
          %824 = vsyncadd %s815, 0
          %s825 = smul.addr %s37, 2
          %s826 = sadd.s32 %s822, %s825
          %s827 = smul.addr %s826, 8
          %s828 = scalar_lea.hbm %s10, %s827
          %s829 = sshll.u32 %s818, 4
          %s830 = int_to_ptr.vmem [resolvable:$true] %s829
          %s831 = sshll.u32 %s828, 4
          %s832 = int_to_ptr.hbm [resolvable:$true] %s831
          %837 = dma.vmem_to_hbm [thread:$0]  %s830, 256, %s832, %s815, 128, 128, 8
        $region92: #{tpu_custom_call.1} parent=59 // pred_fallthru
          _
      $region60: #{tpu_custom_call.1} parent=5 // pred_fallthru
        _
      %p838 = scmp.le.s32.totalorder 2, %s28
      // Predicated region
      $region93: #{tpu_custom_call.1} parent=5 // pred_check
        %p839 = pneg %p838
      $region94: #{tpu_custom_call.1} parent=5 // pred_check_branch
        %841 = sbr.rel (%p839) target = $region96
      $region95: #{tpu_custom_call.1} parent=5 // pred_region
        %s842 = ssub.s32 %s28, 2
        // Predicated region
        $region97: #{tpu_custom_call.1} parent=95 // pred_check
          %p843 = pneg %p298
        $region98: #{tpu_custom_call.1} parent=95 // pred_check_branch
          %845 = sbr.rel (%p843) target = $region100
        $region99: #{tpu_custom_call.1} parent=95 // pred_region
          %s846 = sand.u32 %s283, 1
          %s847 = scalar_lea.sflag [#allocation4], %s846
          %s848 = sand.u32 %s283, 1
          %s849 = smul.addr %s848, 16
          %s850 = scalar_lea.vmem [#allocation15], %s849
          %852 = dma.done %s847, 256
        $region100: #{tpu_custom_call.1} parent=95 // pred_fallthru
          _
      $region96: #{tpu_custom_call.1} parent=5 // pred_fallthru
        _
    $region6: #{tpu_custom_call.1} parent=1 // loop_footer
      %s32 = sadd.s32 1, %s28
    $region7: #{tpu_custom_call.1} parent=1 // loop_footer_branch
      %27 = sbr.rel target = $region3
    $region8: #{tpu_custom_call.1} parent=1 // loop_exit
      _
    %853 = vsyncpa [#allocation3], 1
    %s854 = scalar_lea.sflag [#allocation3], 1
    %855 = vsyncpa %s854, 1
    %856 = vsyncpa [#allocation10], 1
    %s857 = scalar_lea.sflag [#allocation10], 1
    %858 = vsyncpa %s857, 1
    %859 = vsyncpa [#allocation13], 1
    %860 = vsyncpa [#allocation4], 1
    %s861 = scalar_lea.sflag [#allocation4], 1
    %862 = vsyncpa %s861, 1
    %863 = vsyncpa [#allocation5], 1
    %s864 = scalar_lea.sflag [#allocation5], 1
    %865 = vsyncpa %s864, 1
    %866 = vsyncpa [#allocation7], 1

</llo_original>
